<compile_context>
chip_gen: v7x
topology: tpu7x:2x2x1
jax: 0.10.0
libtpu: 0.0.40
codegen_flags: <defaults>
</compile_context>

<pallas_src>
import jax
import jax.numpy as jnp
from jax.experimental import pallas as pl
from jax.experimental.pallas import tpu as pltpu


def _round_up(n: int, m: int) -> int:
    return ((n + m - 1) // m) * m


# --------------------------------------------------------------------------
# Kernel: one batch tile.  out = relu(x @ w1 + b1) @ w2 + b2
# (BatchNorms already folded into w1/b1 and w2/b2; x streamed in bf16.)
# --------------------------------------------------------------------------
def _mlp_kernel(x_ref, w1_ref, b1_ref, w2_ref, b2_ref, o_ref):
    # fc1 (+ folded bn1): bf16 MXU, f32 accumulate.
    acc = jnp.dot(x_ref[...], w1_ref[...], preferred_element_type=jnp.float32)
    # Fused bias + relu + cast: only the bf16 `h` stays live across fc2.
    h = jnp.maximum(acc + b1_ref[...], 0.0).astype(w2_ref.dtype)
    # fc2 (+ folded bn2)
    out = jnp.dot(h, w2_ref[...], preferred_element_type=jnp.float32)
    o_ref[...] = (out + b2_ref[...]).astype(o_ref.dtype)


# --------------------------------------------------------------------------
# One-time parameter preparation (outside the hot path).
#   - fold BN into the linear layers
#   - transpose weights to (in, out)
#   - zero-pad the hidden dim to a multiple of 128; keep d_out exact when tiny
#   - cast weights to the MXU dtype (bf16); biases stay f32
# --------------------------------------------------------------------------
def prepare_params(p, *, eps=1e-5, matmul_dtype=jnp.bfloat16, lane=128):
    w1 = p["w1"].astype(jnp.float32)          # (H, D_in)  PyTorch layout
    w2 = p["w2"].astype(jnp.float32)          # (D_out, H)
    hidden, d_in = w1.shape
    d_out = w2.shape[0]

    # bn1(x) = x*scale1 + shift1   ->  fold into fc1
    scale1 = p["bn1_gamma"] * jax.lax.rsqrt(p["bn1_var"] + eps)
    shift1 = p["bn1_beta"] - p["bn1_mean"] * scale1
    w1f = w1.T * scale1[:, None]              # (D_in, H)
    b1f = p["b1"] + shift1 @ w1.T             # (H,)

    # bn2(h) = h*scale2 + shift2   ->  fold into fc2
    scale2 = p["bn2_gamma"] * jax.lax.rsqrt(p["bn2_var"] + eps)
    shift2 = p["bn2_beta"] - p["bn2_mean"] * scale2
    w2f = w2.T * scale2[:, None]              # (H, D_out)
    b2f = p["b2"] + shift2 @ w2.T             # (D_out,)

    hp = _round_up(hidden, lane)
    # Tiny d_out: exact-width (masked) store writes 16x fewer HBM bytes than a
    # 128-padded lane-dense store + post-kernel slice.  Lane-dense padding only
    # when d_out >= 128.
    dp = d_out if d_out < lane else _round_up(d_out, lane)

    w1p = jnp.zeros((d_in, hp), jnp.float32).at[:, :hidden].set(w1f)
    b1p = jnp.zeros((1, hp), jnp.float32).at[:, :hidden].set(b1f)
    w2p = jnp.zeros((hp, dp), jnp.float32).at[:hidden, :d_out].set(w2f)
    b2p = jnp.zeros((1, dp), jnp.float32).at[:, :d_out].set(b2f)

    return dict(
        w1=w1p.astype(matmul_dtype),
        b1=b1p,                               # f32 (added after f32 accumulate)
        w2=w2p.astype(matmul_dtype),
        b2=b2p,
        d_out=d_out,
    )


# --------------------------------------------------------------------------
# Explicit VMEM budget (bytes) for a given batch tile.
#   streamed x/out tiles are double-buffered; weights single-buffered
#   (Buffered(1)); intermediate h = f32 accumulator + bf16 copy upper bound.
# --------------------------------------------------------------------------
_VMEM_CAP = 48 << 20   # stay well under v7x's 64 MiB physical VMEM


def _vmem_budget_bytes(tb, d_in, hp, dp, w_bytes, x_bytes, o_bytes):
    streamed = 2 * tb * d_in * x_bytes + 2 * tb * dp * o_bytes
    weights = (d_in * hp + hp * dp) * w_bytes
    biases = (hp + dp) * 4
    interm = tb * hp * (4 + w_bytes)
    return streamed + weights + biases + interm


def _resident(shape):
    # Constant block index -> single buffer (default double-buffering would
    # waste a second VMEM copy of the weights/biases).
    return pl.BlockSpec(shape, lambda i: (0, 0), pipeline_mode=pl.Buffered(1))


# --------------------------------------------------------------------------
# Forward pass.  x: (B, D_in)  ->  (B, D_out) f32 (set out_dtype=bf16 if the
# consumer tolerates it: halves output writeback bytes).
# --------------------------------------------------------------------------
def mlp_forward(x, fp, *, block_b=512, out_dtype=jnp.float32):
    B, d_in = x.shape
    w1, b1, w2, b2 = fp["w1"], fp["b1"], fp["w2"], fp["b2"]
    hp = w1.shape[1]
    dp = w2.shape[1]
    d_out = fp["d_out"]

    # Stream activations in the matmul dtype (halves HBM->VMEM DMA bytes vs
    # f32; free if the producer already emits bf16).
    if x.dtype != w1.dtype:
        x = x.astype(w1.dtype)

    w_bytes = jnp.dtype(w1.dtype).itemsize
    x_bytes = jnp.dtype(x.dtype).itemsize
    o_bytes = jnp.dtype(out_dtype).itemsize

    # Batch tile: as large as the VMEM budget allows (per-grid-step overhead
    # ~0.35us); shrink by halving (stays a 128-multiple) if it would not fit.
    tb = min(block_b, B)
    while tb > 128 and _vmem_budget_bytes(tb, d_in, hp, dp,
                                          w_bytes, x_bytes, o_bytes) > _VMEM_CAP:
        tb //= 2
    budget = _vmem_budget_bytes(tb, d_in, hp, dp, w_bytes, x_bytes, o_bytes)
    vmem_limit = int(min(_VMEM_CAP, max(32 << 20, 1.5 * budget)))

    # Ragged last tile is handled by Pallas (padded read, masked writeback):
    # no jnp.pad copy of x in HBM, no garbage rows written back.
    grid = (pl.cdiv(B, tb),)

    out = pl.pallas_call(
        _mlp_kernel,
        out_shape=jax.ShapeDtypeStruct((B, dp), out_dtype),
        grid_spec=pltpu.PrefetchScalarGridSpec(
            num_scalar_prefetch=0,
            grid=grid,
            in_specs=[
                pl.BlockSpec((tb, d_in), lambda i: (i, 0)),   # streamed activations
                _resident((d_in, hp)),                        # VMEM-resident weights
                _resident((1, hp)),
                _resident((hp, dp)),
                _resident((1, dp)),
            ],
            out_specs=pl.BlockSpec((tb, dp), lambda i: (i, 0)),
        ),
        compiler_params=pltpu.CompilerParams(
            # Batch tiles shard across the 2 TensorCores on v7x; near-neutral
            # on single-TC v5e/v6e.
            dimension_semantics=("parallel",),
            vmem_limit_bytes=vmem_limit,
        ),
    )(x, w1, b1, w2, b2)

    return out if dp == d_out else out[:, :d_out]


# --------------------------------------------------------------------------
# Deterministic PyTorch-style init + pure-JAX reference (unfolded, f32).
# --------------------------------------------------------------------------
def init_params(key, input_dim, hidden_dim, output_dim):
    k = jax.random.split(key, 12)
    bound1 = 1.0 / jnp.sqrt(input_dim)
    bound2 = 1.0 / jnp.sqrt(hidden_dim)
    return dict(
        w1=jax.random.uniform(k[0], (hidden_dim, input_dim), jnp.float32, -bound1, bound1),
        b1=jax.random.uniform(k[1], (hidden_dim,), jnp.float32, -bound1, bound1),
        w2=jax.random.uniform(k[2], (output_dim, hidden_dim), jnp.float32, -bound2, bound2),
        b2=jax.random.uniform(k[3], (output_dim,), jnp.float32, -bound2, bound2),
        bn1_gamma=1.0 + 0.1 * jax.random.normal(k[4], (input_dim,), jnp.float32),
        bn1_beta=0.1 * jax.random.normal(k[5], (input_dim,), jnp.float32),
        bn1_mean=0.05 * jax.random.normal(k[6], (input_dim,), jnp.float32),
        bn1_var=jnp.abs(1.0 + 0.1 * jax.random.normal(k[7], (input_dim,), jnp.float32)),
        bn2_gamma=1.0 + 0.1 * jax.random.normal(k[8], (hidden_dim,), jnp.float32),
        bn2_beta=0.1 * jax.random.normal(k[9], (hidden_dim,), jnp.float32),
        bn2_mean=0.05 * jax.random.normal(k[10], (hidden_dim,), jnp.float32),
        bn2_var=jnp.abs(1.0 + 0.1 * jax.random.normal(k[11], (hidden_dim,), jnp.float32)),
    )


def mlp_reference(x, p, eps=1e-5):
    hi = jax.lax.Precision.HIGHEST
    h = (x - p["bn1_mean"]) / jnp.sqrt(p["bn1_var"] + eps) * p["bn1_gamma"] + p["bn1_beta"]
    h = jnp.maximum(jnp.dot(h, p["w1"].T, precision=hi) + p["b1"], 0.0)
    h = (h - p["bn2_mean"]) / jnp.sqrt(p["bn2_var"] + eps) * p["bn2_gamma"] + p["bn2_beta"]
    return jnp.dot(h, p["w2"].T, precision=hi) + p["b2"]


if __name__ == "__main__":
    key = jax.random.PRNGKey(0)
    kx, kp = jax.random.split(key)

    B, INPUT_DIM, HIDDEN_DIM, OUTPUT_DIM = 8, 16, 32, 8
    x = jax.random.normal(kx, (B, INPUT_DIM), jnp.float32)
    params = init_params(kp, INPUT_DIM, HIDDEN_DIM, OUTPUT_DIM)

    # One-time prep (BN folding + transpose + lane padding + bf16 cast).
    folded = prepare_params(params, matmul_dtype=jnp.bfloat16)

    out = jax.block_until_ready(mlp_forward(x, folded))
    ref = mlp_reference(x, params)
    assert out.shape == (B, OUTPUT_DIM)
    assert out.dtype == jnp.float32
    # bf16 MXU inputs/activations -> loosened tolerance vs. the f32 reference.
    assert jnp.allclose(out, ref, atol=5e-2, rtol=5e-2), (
        f"max abs err = {jnp.max(jnp.abs(out - ref))}")

    # Multi-tile + ragged-batch path (no jnp.pad: grid=cdiv, masked last tile).
    B2 = 20
    x2 = jax.random.normal(jax.random.PRNGKey(1), (B2, INPUT_DIM), jnp.float32)
    out2 = jax.block_until_ready(mlp_forward(x2, folded, block_b=16))
    ref2 = mlp_reference(x2, params)
    assert out2.shape == (B2, OUTPUT_DIM)
    assert jnp.allclose(out2, ref2, atol=5e-2, rtol=5e-2), (
        f"max abs err = {jnp.max(jnp.abs(out2 - ref2))}")

    print("KERNEL_OK")
</pallas_src>

<mosaic_0001>
module attributes {stable_mosaic.version = 11 : i64} {
  func.func @_mlp_kernel(%arg0: i32, %arg1: memref<8x16xbf16, #tpu.memory_space<vmem>>, %arg2: memref<16x128xbf16, #tpu.memory_space<vmem>>, %arg3: memref<1x128xf32, #tpu.memory_space<vmem>>, %arg4: memref<128x8xbf16, #tpu.memory_space<vmem>>, %arg5: memref<1x8xf32, #tpu.memory_space<vmem>>, %arg6: memref<8x8xf32, #tpu.memory_space<vmem>>) attributes {dimension_semantics = [#tpu.dimension_semantics<parallel>], iteration_bounds = array<i64: 1>, scalar_prefetch = 0 : i64, scratch_operands = 0 : i64, tpu.core_type = #tpu.core_type<tc>, window_params = [{transform_indices = @transform_0, window_bounds = array<i64: 8, 16>}, {pipeline_mode = #tpu.pipeline_mode<synchronous>, transform_indices = @transform_1, window_bounds = array<i64: 16, 128>}, {pipeline_mode = #tpu.pipeline_mode<synchronous>, transform_indices = @transform_2, window_bounds = array<i64: 1, 128>}, {pipeline_mode = #tpu.pipeline_mode<synchronous>, transform_indices = @transform_3, window_bounds = array<i64: 128, 8>}, {pipeline_mode = #tpu.pipeline_mode<synchronous>, transform_indices = @transform_4, window_bounds = array<i64: 1, 8>}, {transform_indices = @transform_5, window_bounds = array<i64: 8, 8>}]} {
    %c0 = arith.constant 0 : index
    %c0_0 = arith.constant 0 : index
    %0 = vector.load %arg1[%c0, %c0_0] : memref<8x16xbf16, #tpu.memory_space<vmem>>, vector<8x16xbf16>
    %c0_1 = arith.constant 0 : index
    %c0_2 = arith.constant 0 : index
    %1 = vector.load %arg2[%c0_1, %c0_2] : memref<16x128xbf16, #tpu.memory_space<vmem>>, vector<16x128xbf16>
    %cst = arith.constant dense<0.000000e+00> : vector<8x128xf32>
    %2 = tpu.matmul %0, %1, %cst {dimension_numbers = #tpu.dot_dimension_numbers<[1], [0], [0], [1], [0, 0, 1, 1], [], []>} : vector<8x16xbf16>, vector<16x128xbf16>, vector<8x128xf32> -> vector<8x128xf32>
    %c0_3 = arith.constant 0 : index
    %c0_4 = arith.constant 0 : index
    %3 = vector.load %arg3[%c0_3, %c0_4] : memref<1x128xf32, #tpu.memory_space<vmem>>, vector<1x128xf32>
    %4 = vector.broadcast %3 : vector<1x128xf32> to vector<8x128xf32>
    %5 = arith.addf %2, %4 : vector<8x128xf32>
    %cst_5 = arith.constant 0.000000e+00 : f32
    %6 = vector.broadcast %cst_5 : f32 to vector<8x128xf32>
    %7 = arith.maximumf %5, %6 : vector<8x128xf32>
    %8 = arith.truncf %7 : vector<8x128xf32> to vector<8x128xbf16>
    %c0_6 = arith.constant 0 : index
    %c0_7 = arith.constant 0 : index
    %9 = vector.load %arg4[%c0_6, %c0_7] : memref<128x8xbf16, #tpu.memory_space<vmem>>, vector<128x8xbf16>
    %cst_8 = arith.constant dense<0.000000e+00> : vector<8x8xf32>
    %10 = tpu.matmul %8, %9, %cst_8 {dimension_numbers = #tpu.dot_dimension_numbers<[1], [0], [0], [1], [0, 0, 1, 1], [], []>} : vector<8x128xbf16>, vector<128x8xbf16>, vector<8x8xf32> -> vector<8x8xf32>
    %c0_9 = arith.constant 0 : index
    %c0_10 = arith.constant 0 : index
    %11 = vector.load %arg5[%c0_9, %c0_10] : memref<1x8xf32, #tpu.memory_space<vmem>>, vector<1x8xf32>
    %12 = vector.broadcast %11 : vector<1x8xf32> to vector<8x8xf32>
    %13 = arith.addf %10, %12 : vector<8x8xf32>
    %c0_11 = arith.constant 0 : index
    %c0_12 = arith.constant 0 : index
    %14 = vector.load %arg6[%c0_11, %c0_12] : memref<8x8xf32, #tpu.memory_space<vmem>>, vector<8x8xf32>
    tpu.vector_store %arg6[%c0_11, %c0_12], %13 {strides = array<i32>} : memref<8x8xf32, #tpu.memory_space<vmem>>, vector<8x8xf32>,
    return
  }
  func.func @transform_0(%arg0: i32) -> (i32, i32) {
    %c0_i32 = arith.constant 0 : i32
    %c0_i32_0 = arith.constant 0 : i32
    return %arg0, %c0_i32 : i32, i32
  }
  func.func @transform_1(%arg0: i32) -> (i32, i32) {
    %c0_i32 = arith.constant 0 : i32
    %c0_i32_0 = arith.constant 0 : i32
    %c0_i32_1 = arith.constant 0 : i32
    return %c0_i32, %c0_i32_0 : i32, i32
  }
  func.func @transform_2(%arg0: i32) -> (i32, i32) {
    %c0_i32 = arith.constant 0 : i32
    %c0_i32_0 = arith.constant 0 : i32
    %c0_i32_1 = arith.constant 0 : i32
    return %c0_i32, %c0_i32_0 : i32, i32
  }
  func.func @transform_3(%arg0: i32) -> (i32, i32) {
    %c0_i32 = arith.constant 0 : i32
    %c0_i32_0 = arith.constant 0 : i32
    %c0_i32_1 = arith.constant 0 : i32
    return %c0_i32, %c0_i32_0 : i32, i32
  }
  func.func @transform_4(%arg0: i32) -> (i32, i32) {
    %c0_i32 = arith.constant 0 : i32
    %c0_i32_0 = arith.constant 0 : i32
    %c0_i32_1 = arith.constant 0 : i32
    return %c0_i32, %c0_i32_0 : i32, i32
  }
  func.func @transform_5(%arg0: i32) -> (i32, i32) {
    %c0_i32 = arith.constant 0 : i32
    %c0_i32_0 = arith.constant 0 : i32
    return %arg0, %c0_i32 : i32, i32
  }
}

</mosaic_0001>

<llo_original>
// kernel: tpu_custom_call.1
$region0: #{tpu_custom_call.1}
  #allocation0 [shape = 'u32[]', space=smem, size = 0x4, offset = 0x4, fixed_abs, tag = 'smem constant byte address 0x4 - core index']
  #allocation1 [shape = 'u32[144,128]{1,0:T(1,128)}', space=vmem, size = 0x12000, scoped, tag = 'internal scratch']
  %s0 = inlined_call_operand.vmem [shape: bf16[8,16], index: 0, kind: input, shape index: {}]
  %s1 = inlined_call_operand.vmem [shape: bf16[16,128], index: 1, kind: input, shape index: {}]
  %s2 = inlined_call_operand.vmem [shape: f32[1,128], index: 2, kind: input, shape index: {}]
  %s3 = inlined_call_operand.vmem [shape: bf16[128,8], index: 3, kind: input, shape index: {}]
  %s4 = inlined_call_operand.vmem [shape: f32[1,8], index: 4, kind: input, shape index: {}]
  %s5 = inlined_call_operand.hbm [shape: f32[8,8], index: 5, kind: output, shape index: {}]
  %s6 = sld [smem:[#allocation0]]
  $region30: #{tpu_custom_call.1} parent=0
    _
  %s8 = ssub.s32 1, %s6
  %s9 = scalar_select 0, %s8, %s6
  $region1: #{tpu_custom_call.1} parent=0
    #allocation2 [shape = 'u8[4096]{0}', space=vmem, size = 0x1000, scoped, tag = 'output window, operand 0, single buffered']
    #allocation3 [shape = 's32[1]{0}', space=sflag, size = 0x4, scoped, tag = 'scoped memory for tpu_custom_call.1']
    %10 = vsyncpa [#allocation3], 0
    // Predicated region
    $region2: #{tpu_custom_call.1} parent=1 // pred_check
      _
    $region3: #{tpu_custom_call.1} parent=1 // pred_check_branch
      %12 = sbr.rel (0) target = $region5
    $region4: #{tpu_custom_call.1} parent=1 // pred_region
      _
    $region5: #{tpu_custom_call.1} parent=1 // pred_fallthru
      _
    // Predicated region
    $region6: #{tpu_custom_call.1} parent=1 // pred_check
      _
    $region7: #{tpu_custom_call.1} parent=1 // pred_check_branch
      %14 = sbr.rel (0) target = $region9
    $region8: #{tpu_custom_call.1} parent=1 // pred_region
      _
    $region9: #{tpu_custom_call.1} parent=1 // pred_fallthru
      _
    // Predicated region
    $region10: #{tpu_custom_call.1} parent=1 // pred_check
      _
    $region11: #{tpu_custom_call.1} parent=1 // pred_check_branch
      %16 = sbr.rel (0) target = $region13
    $region12: #{tpu_custom_call.1} parent=1 // pred_region
      _
    $region13: #{tpu_custom_call.1} parent=1 // pred_fallthru
      _
    // Predicated region
    $region14: #{tpu_custom_call.1} parent=1 // pred_check
      _
    $region15: #{tpu_custom_call.1} parent=1 // pred_check_branch
      %18 = sbr.rel (0) target = $region17
    $region16: #{tpu_custom_call.1} parent=1 // pred_region
      _
    $region17: #{tpu_custom_call.1} parent=1 // pred_fallthru
      _
    // Predicated region
    $region18: #{tpu_custom_call.1} parent=1 // pred_check
      _
    $region19: #{tpu_custom_call.1} parent=1 // pred_check_branch
      %20 = sbr.rel (0) target = $region21
    $region20: #{tpu_custom_call.1} parent=1 // pred_region
      _
    $region21: #{tpu_custom_call.1} parent=1 // pred_fallthru
      _
    %v22 = vld [vmem:[%s0] sm:$0xf]
    %v23 = vld [vmem:[%s1] sm:$0xf]
    %v24 = vld [vmem:[%s1 + $0x4] sm:$0xf]
    %v25 = vld [vmem:[%s2] sm:$0x1]
    %v27 = vlaneseq
    %v28 = vshrl.u32 %v27, 7
    %v29 = vsub.s32 0, %v28
    %v30 = vrot.slane %v25, %v29
    %v34 = vunpack.c.l.b16 %v23
    %v35 = vunpack.c.l.b16 %v24
    %v36 = vpack.c.b16 %v35, %v34
    %vm38 = vcmask 130048
    %v40 = vsel %vm38, %v22, 0
    %42 = vmatprep.subr.bf16.mxu0 0
    %43 = vmatpush1.bf16.msra.mxu0 %v36
    %44 = vmatprep.subr.bf16.mxu0 0
    %45 = vmatpush1.bf16.msra.mxu0 0
    %46 = vmatprep.subr.bf16.mxu0 0
    %47 = vmatpush1.bf16.msra.mxu0 0
    %48 = vmatprep.subr.bf16.mxu0 0
    %49 = vmatpush1.bf16.msra.mxu0 0
    %50 = vmatprep.subr.bf16.mxu0 0
    %51 = vmatpush1.bf16.msra.mxu0 0
    %52 = vmatprep.subr.bf16.mxu0 0
    %53 = vmatpush1.bf16.msra.mxu0 0
    %54 = vmatprep.subr.bf16.mxu0 0
    %55 = vmatpush1.bf16.msra.mxu0 0
    %56 = vmatprep.subr.bf16.mxu0 0
    %57 = vmatpush1.bf16.msra.mxu0 0
    %58 = vmatprep.subr.bf16.mxu0 0
    %59 = vmatpush1.bf16.msra.mxu0 0
    %60 = vmatprep.subr.bf16.mxu0 0
    %61 = vmatpush1.bf16.msra.mxu0 0
    %62 = vmatprep.subr.bf16.mxu0 0
    %63 = vmatpush1.bf16.msra.mxu0 0
    %64 = vmatprep.subr.bf16.mxu0 0
    %65 = vmatpush1.bf16.msra.mxu0 0
    %66 = vmatprep.subr.bf16.mxu0 0
    %67 = vmatpush1.bf16.msra.mxu0 0
    %68 = vmatprep.subr.bf16.mxu0 0
    %69 = vmatpush1.bf16.msra.mxu0 0
    %70 = vmatprep.subr.bf16.mxu0 0
    %71 = vmatpush1.bf16.msra.mxu0 0
    %72 = vmatprep.subr.bf16.mxu0 0
    %73 = vmatpush1.bf16.msra.mxu0 0
    %74 = vmatprep.mubr.bf16.mxu0 0
    %75 = vmatmul.mubr.bf16.gmra.mrb[0].mxu0 %v40
    %v76 = vpop.f32.mrb[0].mxu0
    %v77 = vadd.f32 %v30, %v76
    %v78 = vpop.f32.mrb[0].mxu0
    %v79 = vpop.f32.mrb[0].mxu0
    %v80 = vpop.f32.mrb[0].mxu0
    %81 = vdwg.mxu0
    %v82 = vmax.f32 %v77, 0.0
    %v83 = vpack.c.bf16 %v82, %v82
    %v84 = vld [vmem:[%s3] sm:$0xf]
    %v85 = vld [vmem:[%s3 + $0x4] sm:$0xf]
    %v86 = vld [vmem:[%s3 + $0x8] sm:$0xf]
    %v87 = vld [vmem:[%s3 + $0xc] sm:$0xf]
    %v88 = vld [vmem:[%s3 + $0x10] sm:$0xf]
    %v89 = vld [vmem:[%s3 + $0x14] sm:$0xf]
    %v90 = vld [vmem:[%s3 + $0x18] sm:$0xf]
    %v91 = vld [vmem:[%s3 + $0x1c] sm:$0xf]
    %v92 = vld [vmem:[%s3 + $0x20] sm:$0xf]
    %v93 = vld [vmem:[%s3 + $0x24] sm:$0xf]
    %v94 = vld [vmem:[%s3 + $0x28] sm:$0xf]
    %v95 = vld [vmem:[%s3 + $0x2c] sm:$0xf]
    %v96 = vld [vmem:[%s3 + $0x30] sm:$0xf]
    %v97 = vld [vmem:[%s3 + $0x34] sm:$0xf]
    %v98 = vld [vmem:[%s3 + $0x38] sm:$0xf]
    %v99 = vld [vmem:[%s3 + $0x3c] sm:$0xf]
    %v100 = vld [vmem:[%s4] sm:$0x1]
    %v102 = vlaneseq
    %v103 = vshrl.u32 %v102, 7
    %v104 = vsub.s32 0, %v103
    %v105 = vrot.slane %v100, %v104
    %v123 = vunpack.c.l.b16 %v84
    %v124 = vunpack.c.l.b16 %v85
    %v125 = vunpack.c.l.b16 %v86
    %v126 = vunpack.c.l.b16 %v87
    %v127 = vunpack.c.l.b16 %v88
    %v128 = vunpack.c.l.b16 %v89
    %v129 = vunpack.c.l.b16 %v90
    %v130 = vunpack.c.l.b16 %v91
    %v131 = vunpack.c.l.b16 %v92
    %v132 = vunpack.c.l.b16 %v93
    %v133 = vunpack.c.l.b16 %v94
    %v134 = vunpack.c.l.b16 %v95
    %v135 = vunpack.c.l.b16 %v96
    %v136 = vunpack.c.l.b16 %v97
    %v137 = vunpack.c.l.b16 %v98
    %v138 = vunpack.c.l.b16 %v99
    %v139 = vpack.c.b16 %v124, %v123
    %v140 = vpack.c.b16 %v126, %v125
    %v141 = vpack.c.b16 %v128, %v127
    %v142 = vpack.c.b16 %v130, %v129
    %v143 = vpack.c.b16 %v132, %v131
    %v144 = vpack.c.b16 %v134, %v133
    %v145 = vpack.c.b16 %v136, %v135
    %v146 = vpack.c.b16 %v138, %v137
    %155 = vmatprep.subr.bf16.mxu0 0
    %156 = vmatpush1.bf16.msra.mxu0 %v139
    %157 = vmatprep.subr.bf16.mxu0 0
    %158 = vmatpush1.bf16.msra.mxu0 %v140
    %159 = vmatprep.subr.bf16.mxu0 0
    %160 = vmatpush1.bf16.msra.mxu0 %v141
    %161 = vmatprep.subr.bf16.mxu0 0
    %162 = vmatpush1.bf16.msra.mxu0 %v142
    %163 = vmatprep.subr.bf16.mxu0 0
    %164 = vmatpush1.bf16.msra.mxu0 %v143
    %165 = vmatprep.subr.bf16.mxu0 0
    %166 = vmatpush1.bf16.msra.mxu0 %v144
    %167 = vmatprep.subr.bf16.mxu0 0
    %168 = vmatpush1.bf16.msra.mxu0 %v145
    %169 = vmatprep.subr.bf16.mxu0 0
    %170 = vmatpush1.bf16.msra.mxu0 %v146
    %171 = vmatprep.subr.bf16.mxu0 0
    %172 = vmatpush1.bf16.msra.mxu0 0
    %173 = vmatprep.subr.bf16.mxu0 0
    %174 = vmatpush1.bf16.msra.mxu0 0
    %175 = vmatprep.subr.bf16.mxu0 0
    %176 = vmatpush1.bf16.msra.mxu0 0
    %177 = vmatprep.subr.bf16.mxu0 0
    %178 = vmatpush1.bf16.msra.mxu0 0
    %179 = vmatprep.subr.bf16.mxu0 0
    %180 = vmatpush1.bf16.msra.mxu0 0
    %181 = vmatprep.subr.bf16.mxu0 0
    %182 = vmatpush1.bf16.msra.mxu0 0
    %183 = vmatprep.subr.bf16.mxu0 0
    %184 = vmatpush1.bf16.msra.mxu0 0
    %185 = vmatprep.subr.bf16.mxu0 0
    %186 = vmatpush1.bf16.msra.mxu0 0
    %187 = vmatprep.mubr.bf16.mxu0 0
    %188 = vmatmul.mubr.bf16.gmra.mrb[0].mxu0 %v83
    %v189 = vpop.f32.mrb[0].mxu0
    %v190 = vadd.f32 %v105, %v189
    %v191 = vpop.f32.mrb[0].mxu0
    %v192 = vpop.f32.mrb[0].mxu0
    %v193 = vpop.f32.mrb[0].mxu0
    %194 = vdwg.mxu0
    %vm195 = vcmask 64512
    %196 = vst.msk [vmem:[#allocation2] sm:$0xff] %vm195, %v190
    // Predicated region
    $region22: #{tpu_custom_call.1} parent=1 // pred_check
      _
    $region23: #{tpu_custom_call.1} parent=1 // pred_check_branch
      %198 = sbr.rel (0) target = $region25
    $region24: #{tpu_custom_call.1} parent=1 // pred_region
      %s200 = ssub.s32 128, 128
      %201 = vsyncadd [#allocation3], %s200
      %s203 = sshll.u32 [#allocation2], 4
      %s204 = int_to_ptr.vmem [resolvable:$true] %s203
      %206 = dma.vmem_to_hbm [thread:$0]  %s204, 128, %s5, [#allocation3]
    $region25: #{tpu_custom_call.1} parent=1 // pred_fallthru
      _
    // Predicated region
    $region26: #{tpu_custom_call.1} parent=1 // pred_check
      _
    $region27: #{tpu_custom_call.1} parent=1 // pred_check_branch
      %208 = sbr.rel (0) target = $region29
    $region28: #{tpu_custom_call.1} parent=1 // pred_region
      %209 = dma.done [#allocation3], 128
    $region29: #{tpu_custom_call.1} parent=1 // pred_fallthru
      _
    %210 = vsyncpa [#allocation3], 1

</llo_original>
